<compile_context>
chip_gen: v7x
topology: tpu7x:2x2x1
jax: 0.10.0
libtpu: 0.0.40
codegen_flags: <defaults>
</compile_context>

<pallas_src>
from functools import partial

import jax
import jax.numpy as jnp
from jax.experimental import pallas as pl
from jax.experimental.pallas import tpu as pltpu


def _round_up(n: int, m: int) -> int:
    return ((n + m - 1) // m) * m


def _qnet_kernel(x_ref, w1_ref, b1_ref, w2_ref, b2_ref, o_ref):
    # fc1: (B, In) @ (In, Hp) -> f32, + bias, ReLU (bias/relu ride in VPU slots).
    h = jnp.dot(x_ref[...], w1_ref[...], preferred_element_type=jnp.float32)
    h = jnp.maximum(h + b1_ref[...], 0.0)
    # fc2: (B, Hp) @ (Hp, Out) -> f32, + bias. Cast h to the weight dtype so the
    # MXU runs at native bf16 rate when compute_dtype=bf16 (no-op for f32).
    y = jnp.dot(h.astype(w2_ref.dtype), w2_ref[...],
                preferred_element_type=jnp.float32)
    o_ref[...] = (y + b2_ref[...]).astype(o_ref.dtype)


def prepare_qnet_params(w1, b1, w2, b2, *, compute_dtype=jnp.float32):
    """Pad/cast parameters ONCE at model init.

    w1: (In, H), b1: (H,), w2: (H, Out), b2: (Out,)  [already transposed vs torch]
    Hidden width is zero-padded to a multiple of 128 (lane-dense intermediate);
    the padding is semantically inert: relu(0*x + 0) = 0 and the padded rows of
    w2 are zero.  Output width is left unpadded (no writeback inflation).
    """
    In, H = w1.shape
    Out = w2.shape[1]
    Hp = _round_up(H, 128)
    w1p = jnp.pad(w1, ((0, 0), (0, Hp - H))).astype(compute_dtype)
    b1p = jnp.pad(b1, (0, Hp - H)).reshape(1, Hp).astype(jnp.float32)
    w2p = jnp.pad(w2, ((0, Hp - H), (0, 0))).astype(compute_dtype)
    b2p = b2.reshape(1, Out).astype(jnp.float32)
    return w1p, b1p, w2p, b2p


@partial(jax.jit, static_argnames=("batch_tile",))
def linear_qnet_forward(x, w1p, b1p, w2p, b2p, *, batch_tile=1024):
    """x: (B, In); params from prepare_qnet_params(). Returns f32 (B, Out)."""
    B, In = x.shape
    Hp = w1p.shape[1]
    Out = w2p.shape[1]
    out_dtype = jnp.float32

    x = x.astype(w1p.dtype)  # bf16 activations when compute_dtype=bf16
    Bp = _round_up(B, 8)

    if Bp <= batch_tile:
        # Latency path: no grid, no pipelining, everything resident in VMEM.
        xp = x if Bp == B else jnp.pad(x, ((0, Bp - B), (0, 0)))
        vmem = pltpu.MemorySpace.VMEM
        out = pl.pallas_call(
            _qnet_kernel,
            out_shape=jax.ShapeDtypeStruct((Bp, Out), out_dtype),
            in_specs=[pl.BlockSpec(memory_space=vmem)] * 5,
            out_specs=pl.BlockSpec(memory_space=vmem),
        )(xp, w1p, b1p, w2p, b2p)
    else:
        # Throughput path: tile only the batch axis. Weights/biases map to block
        # (0, 0) every step (VMEM resident); activation/output DMA overlaps
        # compute via the standard BlockSpec pipeline. Grid length is forced to
        # be even so v7x's two TensorCores split the "parallel" axis evenly.
        n_tiles = pl.cdiv(Bp, batch_tile)
        if n_tiles > 1 and n_tiles % 2 == 1:
            n_tiles += 1
        tile = _round_up(pl.cdiv(Bp, n_tiles), 8)
        Bt = n_tiles * tile
        xp = x if Bt == B else jnp.pad(x, ((0, Bt - B), (0, 0)))  # single pad
        out = pl.pallas_call(
            _qnet_kernel,
            out_shape=jax.ShapeDtypeStruct((Bt, Out), out_dtype),
            grid_spec=pl.GridSpec(
                grid=(n_tiles,),
                in_specs=[
                    pl.BlockSpec((tile, In), lambda i: (i, 0)),
                    pl.BlockSpec((In, Hp), lambda i: (0, 0)),
                    pl.BlockSpec((1, Hp), lambda i: (0, 0)),
                    pl.BlockSpec((Hp, Out), lambda i: (0, 0)),
                    pl.BlockSpec((1, Out), lambda i: (0, 0)),
                ],
                out_specs=pl.BlockSpec((tile, Out), lambda i: (i, 0)),
            ),
            compiler_params=pltpu.CompilerParams(
                dimension_semantics=("parallel",)
            ),
        )(xp, w1p, b1p, w2p, b2p)

    # TODO(synk): if the consumer lives in the same jit and tolerates padded
    # batch rows, this slice can be dropped entirely.
    return out if out.shape[0] == B else out[:B]


if __name__ == "__main__":
    # Shapes implied by Linear_QNet(input_size, hidden_size, output_size):
    # input=16, hidden=32, output=8.
    IN, HID, OUT = 16, 32, 8

    key = jax.random.PRNGKey(0)
    kx, k1, kb1, k2, kb2, kx2 = jax.random.split(key, 6)

    # Deterministic synthetic parameters (PyTorch nn.Linear-style uniform init).
    bound1 = 1.0 / (IN ** 0.5)
    bound2 = 1.0 / (HID ** 0.5)
    w1 = jax.random.uniform(k1, (IN, HID), jnp.float32, -bound1, bound1)
    b1 = jax.random.uniform(kb1, (HID,), jnp.float32, -bound1, bound1)
    w2 = jax.random.uniform(k2, (HID, OUT), jnp.float32, -bound2, bound2)
    b2 = jax.random.uniform(kb2, (OUT,), jnp.float32, -bound2, bound2)

    # Parameters padded ONCE (f32 and bf16 variants).
    p_f32 = prepare_qnet_params(w1, b1, w2, b2, compute_dtype=jnp.float32)
    p_bf16 = prepare_qnet_params(w1, b1, w2, b2, compute_dtype=jnp.bfloat16)

    # 1) Small latency-path batch (online inference, B=8) -> no-grid VMEM path.
    B_small = 8
    x_small = jax.random.normal(kx, (B_small, IN), dtype=jnp.float32)
    y_small = jax.block_until_ready(linear_qnet_forward(x_small, *p_f32))
    ref_small = jnp.maximum(x_small @ w1 + b1, 0.0) @ w2 + b2
    assert y_small.shape == (B_small, OUT)
    assert jnp.allclose(y_small, ref_small, atol=1e-5, rtol=1e-5)

    # 2) Batched replay-buffer-style batch (non-multiple of tile) -> tiled path
    #    with an even grid (cdiv(600,256)=3 -> bumped to 4 tiles of 152 rows).
    B_big = 600
    x_big = jax.random.normal(kx2, (B_big, IN), dtype=jnp.float32)
    y_big = jax.block_until_ready(
        linear_qnet_forward(x_big, *p_f32, batch_tile=256)
    )
    ref_big = jnp.maximum(x_big @ w1 + b1, 0.0) @ w2 + b2
    assert y_big.shape == (B_big, OUT)
    assert jnp.allclose(y_big, ref_big, atol=1e-5, rtol=1e-5)

    # 3) bf16 activations/weights (v6e/v7x fast path), f32 accumulation/bias.
    y_bf16 = jax.block_until_ready(
        linear_qnet_forward(x_big, *p_bf16, batch_tile=256)
    )
    assert y_bf16.shape == (B_big, OUT)
    assert jnp.allclose(y_bf16, ref_big, atol=1e-1, rtol=1e-1)

    print("KERNEL_OK")
</pallas_src>

<mosaic_0001>
module attributes {stable_mosaic.version = 11 : i64} {
  func.func @_qnet_kernel(%arg0: memref<8x16xf32, #tpu.memory_space<vmem>>, %arg1: memref<16x128xf32, #tpu.memory_space<vmem>>, %arg2: memref<1x128xf32, #tpu.memory_space<vmem>>, %arg3: memref<128x8xf32, #tpu.memory_space<vmem>>, %arg4: memref<1x8xf32, #tpu.memory_space<vmem>>, %arg5: memref<8x8xf32, #tpu.memory_space<vmem>>) attributes {dimension_semantics = [], scalar_prefetch = 0 : i64, scratch_operands = 0 : i64, tpu.core_type = #tpu.core_type<tc>} {
    %c0 = arith.constant 0 : index
    %c0_0 = arith.constant 0 : index
    %0 = vector.load %arg0[%c0, %c0_0] : memref<8x16xf32, #tpu.memory_space<vmem>>, vector<8x16xf32>
    %c0_1 = arith.constant 0 : index
    %c0_2 = arith.constant 0 : index
    %1 = vector.load %arg1[%c0_1, %c0_2] : memref<16x128xf32, #tpu.memory_space<vmem>>, vector<16x128xf32>
    %cst = arith.constant dense<0.000000e+00> : vector<8x128xf32>
    %2 = tpu.matmul %0, %1, %cst {dimension_numbers = #tpu.dot_dimension_numbers<[1], [0], [0], [1], [0, 0, 1, 1], [], []>} : vector<8x16xf32>, vector<16x128xf32>, vector<8x128xf32> -> vector<8x128xf32>
    %c0_3 = arith.constant 0 : index
    %c0_4 = arith.constant 0 : index
    %3 = vector.load %arg2[%c0_3, %c0_4] : memref<1x128xf32, #tpu.memory_space<vmem>>, vector<1x128xf32>
    %4 = vector.broadcast %3 : vector<1x128xf32> to vector<8x128xf32>
    %5 = arith.addf %2, %4 : vector<8x128xf32>
    %cst_5 = arith.constant 0.000000e+00 : f32
    %6 = vector.broadcast %cst_5 : f32 to vector<8x128xf32>
    %7 = arith.maximumf %5, %6 : vector<8x128xf32>
    %c0_6 = arith.constant 0 : index
    %c0_7 = arith.constant 0 : index
    %8 = vector.load %arg3[%c0_6, %c0_7] : memref<128x8xf32, #tpu.memory_space<vmem>>, vector<128x8xf32>
    %cst_8 = arith.constant dense<0.000000e+00> : vector<8x8xf32>
    %9 = tpu.matmul %7, %8, %cst_8 {dimension_numbers = #tpu.dot_dimension_numbers<[1], [0], [0], [1], [0, 0, 1, 1], [], []>} : vector<8x128xf32>, vector<128x8xf32>, vector<8x8xf32> -> vector<8x8xf32>
    %c0_9 = arith.constant 0 : index
    %c0_10 = arith.constant 0 : index
    %10 = vector.load %arg4[%c0_9, %c0_10] : memref<1x8xf32, #tpu.memory_space<vmem>>, vector<1x8xf32>
    %11 = vector.broadcast %10 : vector<1x8xf32> to vector<8x8xf32>
    %12 = arith.addf %9, %11 : vector<8x8xf32>
    %c0_11 = arith.constant 0 : index
    %c0_12 = arith.constant 0 : index
    %13 = vector.load %arg5[%c0_11, %c0_12] : memref<8x8xf32, #tpu.memory_space<vmem>>, vector<8x8xf32>
    tpu.vector_store %arg5[%c0_11, %c0_12], %12 {strides = array<i32>} : memref<8x8xf32, #tpu.memory_space<vmem>>, vector<8x8xf32>,
    return
  }
}

</mosaic_0001>

<llo_original>
// kernel: linear_qnet_forward.1
$region0: #{linear_qnet_forward.1}
  #allocation0 [shape = 'u32[]', space=smem, size = 0x4, offset = 0x4, fixed_abs, tag = 'smem constant byte address 0x4 - core index']
  #allocation1 [shape = 'u32[144,128]{1,0:T(1,128)}', space=vmem, size = 0x12000, scoped, tag = 'internal scratch']
  %s0 = inlined_call_operand.vmem [shape: f32[8,16], index: 0, kind: input, shape index: {}]
  %s1 = inlined_call_operand.vmem [shape: f32[16,128], index: 1, kind: input, shape index: {}]
  %s2 = inlined_call_operand.vmem [shape: f32[1,128], index: 2, kind: input, shape index: {}]
  %s3 = inlined_call_operand.vmem [shape: f32[128,8], index: 3, kind: input, shape index: {}]
  %s4 = inlined_call_operand.vmem [shape: f32[1,8], index: 4, kind: input, shape index: {}]
  %s5 = inlined_call_operand.hbm [shape: f32[8,8], index: 5, kind: output, shape index: {}]
  %s6 = sld [smem:[#allocation0]]
  $region30: #{linear_qnet_forward.1} parent=0
    _
  %s8 = ssub.s32 1, %s6
  %s9 = scalar_select 0, %s8, %s6
  $region1: #{linear_qnet_forward.1} parent=0
    #allocation2 [shape = 'u8[4096]{0}', space=vmem, size = 0x1000, scoped, tag = 'output window, operand 0, single buffered']
    #allocation3 [shape = 's32[1]{0}', space=sflag, size = 0x4, scoped, tag = 'scoped memory for linear_qnet_forward.1']
    %10 = vsyncpa [#allocation3], 0
    // Predicated region
    $region2: #{linear_qnet_forward.1} parent=1 // pred_check
      _
    $region3: #{linear_qnet_forward.1} parent=1 // pred_check_branch
      %12 = sbr.rel (0) target = $region5
    $region4: #{linear_qnet_forward.1} parent=1 // pred_region
      _
    $region5: #{linear_qnet_forward.1} parent=1 // pred_fallthru
      _
    // Predicated region
    $region6: #{linear_qnet_forward.1} parent=1 // pred_check
      _
    $region7: #{linear_qnet_forward.1} parent=1 // pred_check_branch
      %14 = sbr.rel (0) target = $region9
    $region8: #{linear_qnet_forward.1} parent=1 // pred_region
      _
    $region9: #{linear_qnet_forward.1} parent=1 // pred_fallthru
      _
    // Predicated region
    $region10: #{linear_qnet_forward.1} parent=1 // pred_check
      _
    $region11: #{linear_qnet_forward.1} parent=1 // pred_check_branch
      %16 = sbr.rel (0) target = $region13
    $region12: #{linear_qnet_forward.1} parent=1 // pred_region
      _
    $region13: #{linear_qnet_forward.1} parent=1 // pred_fallthru
      _
    // Predicated region
    $region14: #{linear_qnet_forward.1} parent=1 // pred_check
      _
    $region15: #{linear_qnet_forward.1} parent=1 // pred_check_branch
      %18 = sbr.rel (0) target = $region17
    $region16: #{linear_qnet_forward.1} parent=1 // pred_region
      _
    $region17: #{linear_qnet_forward.1} parent=1 // pred_fallthru
      _
    // Predicated region
    $region18: #{linear_qnet_forward.1} parent=1 // pred_check
      _
    $region19: #{linear_qnet_forward.1} parent=1 // pred_check_branch
      %20 = sbr.rel (0) target = $region21
    $region20: #{linear_qnet_forward.1} parent=1 // pred_region
      _
    $region21: #{linear_qnet_forward.1} parent=1 // pred_fallthru
      _
    %v21 = vld [vmem:[%s0] sm:$0xff]
    %v22 = vld [vmem:[%s1] sm:$0xff]
    %v23 = vld [vmem:[%s1 + $0x8] sm:$0xff]
    %v24 = vld [vmem:[%s2] sm:$0x1]
    %v26 = vlaneseq
    %v27 = vshrl.u32 %v26, 7
    %v28 = vsub.s32 0, %v27
    %v29 = vrot.slane %v24, %v28
    %vm31 = vcmask 130048
    %v33 = vsel %vm31, %v21, 0
    %35 = vmatprep.subr.mxu0 0.0
    %36 = vmatpush1.msra.mxu0 %v22
    %37 = vmatprep.subr.mxu0 0.0
    %38 = vmatpush1.msra.mxu0 %v23
    %39 = vmatprep.subr.mxu0 0.0
    %40 = vmatpush1.msra.mxu0 0.0
    %41 = vmatprep.subr.mxu0 0.0
    %42 = vmatpush1.msra.mxu0 0.0
    %43 = vmatprep.subr.mxu0 0.0
    %44 = vmatpush1.msra.mxu0 0.0
    %45 = vmatprep.subr.mxu0 0.0
    %46 = vmatpush1.msra.mxu0 0.0
    %47 = vmatprep.subr.mxu0 0.0
    %48 = vmatpush1.msra.mxu0 0.0
    %49 = vmatprep.subr.mxu0 0.0
    %50 = vmatpush1.msra.mxu0 0.0
    %51 = vmatprep.subr.mxu0 0.0
    %52 = vmatpush1.msra.mxu0 0.0
    %53 = vmatprep.subr.mxu0 0.0
    %54 = vmatpush1.msra.mxu0 0.0
    %55 = vmatprep.subr.mxu0 0.0
    %56 = vmatpush1.msra.mxu0 0.0
    %57 = vmatprep.subr.mxu0 0.0
    %58 = vmatpush1.msra.mxu0 0.0
    %59 = vmatprep.subr.mxu0 0.0
    %60 = vmatpush1.msra.mxu0 0.0
    %61 = vmatprep.subr.mxu0 0.0
    %62 = vmatpush1.msra.mxu0 0.0
    %63 = vmatprep.subr.mxu0 0.0
    %64 = vmatpush1.msra.mxu0 0.0
    %65 = vmatprep.subr.mxu0 0.0
    %66 = vmatpush1.msra.mxu0 0.0
    %67 = vmatprep.subr.mxu0 0.0
    %68 = vmatpush1.msra.mxu0 0.0
    %69 = vmatprep.subr.mxu0 0.0
    %70 = vmatpush1.msra.mxu0 0.0
    %71 = vmatprep.subr.mxu0 0.0
    %72 = vmatpush1.msra.mxu0 0.0
    %73 = vmatprep.subr.mxu0 0.0
    %74 = vmatpush1.msra.mxu0 0.0
    %75 = vmatprep.subr.mxu0 0.0
    %76 = vmatpush1.msra.mxu0 0.0
    %77 = vmatprep.subr.mxu0 0.0
    %78 = vmatpush1.msra.mxu0 0.0
    %79 = vmatprep.subr.mxu0 0.0
    %80 = vmatpush1.msra.mxu0 0.0
    %81 = vmatprep.subr.mxu0 0.0
    %82 = vmatpush1.msra.mxu0 0.0
    %83 = vmatprep.subr.mxu0 0.0
    %84 = vmatpush1.msra.mxu0 0.0
    %85 = vmatprep.subr.mxu0 0.0
    %86 = vmatpush1.msra.mxu0 0.0
    %87 = vmatprep.subr.mxu0 0.0
    %88 = vmatpush1.msra.mxu0 0.0
    %89 = vmatprep.subr.mxu0 0.0
    %90 = vmatpush1.msra.mxu0 0.0
    %91 = vmatprep.subr.mxu0 0.0
    %92 = vmatpush1.msra.mxu0 0.0
    %93 = vmatprep.subr.mxu0 0.0
    %94 = vmatpush1.msra.mxu0 0.0
    %95 = vmatprep.subr.mxu0 0.0
    %96 = vmatpush1.msra.mxu0 0.0
    %97 = vmatprep.subr.mxu0 0.0
    %98 = vmatpush1.msra.mxu0 0.0
    %99 = vmatprep.mubr.f32.mxu0 0.0
    %100 = vmatmul.mubr.f32.gmra.mrb[0].mxu0 %v33
    %v101 = vpop.f32.mrb[0].mxu0
    %v102 = vadd.f32 %v29, %v101
    %v103 = vpop.f32.mrb[0].mxu0
    %104 = vdwg.mxu0
    %v105 = vmax.f32 %v102, 0.0
    %v106 = vld [vmem:[%s3] sm:$0xff]
    %v107 = vld [vmem:[%s3 + $0x8] sm:$0xff]
    %v108 = vld [vmem:[%s3 + $0x10] sm:$0xff]
    %v109 = vld [vmem:[%s3 + $0x18] sm:$0xff]
    %v110 = vld [vmem:[%s3 + $0x20] sm:$0xff]
    %v111 = vld [vmem:[%s3 + $0x28] sm:$0xff]
    %v112 = vld [vmem:[%s3 + $0x30] sm:$0xff]
    %v113 = vld [vmem:[%s3 + $0x38] sm:$0xff]
    %v114 = vld [vmem:[%s3 + $0x40] sm:$0xff]
    %v115 = vld [vmem:[%s3 + $0x48] sm:$0xff]
    %v116 = vld [vmem:[%s3 + $0x50] sm:$0xff]
    %v117 = vld [vmem:[%s3 + $0x58] sm:$0xff]
    %v118 = vld [vmem:[%s3 + $0x60] sm:$0xff]
    %v119 = vld [vmem:[%s3 + $0x68] sm:$0xff]
    %v120 = vld [vmem:[%s3 + $0x70] sm:$0xff]
    %v121 = vld [vmem:[%s3 + $0x78] sm:$0xff]
    %v122 = vld [vmem:[%s4] sm:$0x1]
    %v124 = vlaneseq
    %v125 = vshrl.u32 %v124, 7
    %v126 = vsub.s32 0, %v125
    %v127 = vrot.slane %v122, %v126
    %129 = vmatprep.subr.mxu0 0.0
    %130 = vmatpush1.msra.mxu0 %v106
    %131 = vmatprep.subr.mxu0 0.0
    %132 = vmatpush1.msra.mxu0 %v107
    %133 = vmatprep.subr.mxu0 0.0
    %134 = vmatpush1.msra.mxu0 %v108
    %135 = vmatprep.subr.mxu0 0.0
    %136 = vmatpush1.msra.mxu0 %v109
    %137 = vmatprep.subr.mxu0 0.0
    %138 = vmatpush1.msra.mxu0 %v110
    %139 = vmatprep.subr.mxu0 0.0
    %140 = vmatpush1.msra.mxu0 %v111
    %141 = vmatprep.subr.mxu0 0.0
    %142 = vmatpush1.msra.mxu0 %v112
    %143 = vmatprep.subr.mxu0 0.0
    %144 = vmatpush1.msra.mxu0 %v113
    %145 = vmatprep.subr.mxu0 0.0
    %146 = vmatpush1.msra.mxu0 %v114
    %147 = vmatprep.subr.mxu0 0.0
    %148 = vmatpush1.msra.mxu0 %v115
    %149 = vmatprep.subr.mxu0 0.0
    %150 = vmatpush1.msra.mxu0 %v116
    %151 = vmatprep.subr.mxu0 0.0
    %152 = vmatpush1.msra.mxu0 %v117
    %153 = vmatprep.subr.mxu0 0.0
    %154 = vmatpush1.msra.mxu0 %v118
    %155 = vmatprep.subr.mxu0 0.0
    %156 = vmatpush1.msra.mxu0 %v119
    %157 = vmatprep.subr.mxu0 0.0
    %158 = vmatpush1.msra.mxu0 %v120
    %159 = vmatprep.subr.mxu0 0.0
    %160 = vmatpush1.msra.mxu0 %v121
    %161 = vmatprep.subr.mxu0 0.0
    %162 = vmatpush1.msra.mxu0 0.0
    %163 = vmatprep.subr.mxu0 0.0
    %164 = vmatpush1.msra.mxu0 0.0
    %165 = vmatprep.subr.mxu0 0.0
    %166 = vmatpush1.msra.mxu0 0.0
    %167 = vmatprep.subr.mxu0 0.0
    %168 = vmatpush1.msra.mxu0 0.0
    %169 = vmatprep.subr.mxu0 0.0
    %170 = vmatpush1.msra.mxu0 0.0
    %171 = vmatprep.subr.mxu0 0.0
    %172 = vmatpush1.msra.mxu0 0.0
    %173 = vmatprep.subr.mxu0 0.0
    %174 = vmatpush1.msra.mxu0 0.0
    %175 = vmatprep.subr.mxu0 0.0
    %176 = vmatpush1.msra.mxu0 0.0
    %177 = vmatprep.subr.mxu0 0.0
    %178 = vmatpush1.msra.mxu0 0.0
    %179 = vmatprep.subr.mxu0 0.0
    %180 = vmatpush1.msra.mxu0 0.0
    %181 = vmatprep.subr.mxu0 0.0
    %182 = vmatpush1.msra.mxu0 0.0
    %183 = vmatprep.subr.mxu0 0.0
    %184 = vmatpush1.msra.mxu0 0.0
    %185 = vmatprep.subr.mxu0 0.0
    %186 = vmatpush1.msra.mxu0 0.0
    %187 = vmatprep.subr.mxu0 0.0
    %188 = vmatpush1.msra.mxu0 0.0
    %189 = vmatprep.subr.mxu0 0.0
    %190 = vmatpush1.msra.mxu0 0.0
    %191 = vmatprep.subr.mxu0 0.0
    %192 = vmatpush1.msra.mxu0 0.0
    %193 = vmatprep.mubr.f32.mxu0 0.0
    %194 = vmatmul.mubr.f32.gmra.mrb[0].mxu0 %v105
    %v195 = vpop.f32.mrb[0].mxu0
    %v196 = vadd.f32 %v127, %v195
    %v197 = vpop.f32.mrb[0].mxu0
    %198 = vdwg.mxu0
    %vm199 = vcmask 64512
    %200 = vst.msk [vmem:[#allocation2] sm:$0xff] %vm199, %v196
    // Predicated region
    $region22: #{linear_qnet_forward.1} parent=1 // pred_check
      _
    $region23: #{linear_qnet_forward.1} parent=1 // pred_check_branch
      %202 = sbr.rel (0) target = $region25
    $region24: #{linear_qnet_forward.1} parent=1 // pred_region
      %s204 = ssub.s32 128, 128
      %205 = vsyncadd [#allocation3], %s204
      %s207 = sshll.u32 [#allocation2], 4
      %s208 = int_to_ptr.vmem [resolvable:$true] %s207
      %210 = dma.vmem_to_hbm [thread:$0]  %s208, 128, %s5, [#allocation3]
    $region25: #{linear_qnet_forward.1} parent=1 // pred_fallthru
      _
    // Predicated region
    $region26: #{linear_qnet_forward.1} parent=1 // pred_check
      _
    $region27: #{linear_qnet_forward.1} parent=1 // pred_check_branch
      %212 = sbr.rel (0) target = $region29
    $region28: #{linear_qnet_forward.1} parent=1 // pred_region
      %213 = dma.done [#allocation3], 128
    $region29: #{linear_qnet_forward.1} parent=1 // pred_fallthru
      _
    %214 = vsyncpa [#allocation3], 1

</llo_original>
